<compile_context>
chip_gen: v5e
topology: v5e:2x2
jax: 0.10.0
libtpu: 0.0.40
codegen_flags: <defaults>
</compile_context>

<pallas_src>
import jax
import jax.numpy as jnp
from jax import lax
from jax.experimental import pallas as pl
from jax.experimental.pallas import tpu as pltpu

LN_EPS = 1e-5  # nn.LayerNorm default eps


def _reason_kernel(w_ref, gamma_ref, beta_ref, x_ref, o_ref):
    # w_ref:     (N, N)      Conv1d(k=1) token-mix weight (untiled, resident across steps)
    # gamma_ref: (1, D)      LayerNorm weight
    # beta_ref:  (1, D)      LayerNorm bias
    # x_ref:     (Bt, N, D)  current batch block of x
    # o_ref:     (Bt, N, D)  output block (aliased onto x's HBM buffer)
    bt, n, d = x_ref.shape
    x = x_ref[...].astype(jnp.float32)                             # (Bt, N, D)

    # LayerNorm over the feature dim (biased variance, eps inside rsqrt — nn.LayerNorm).
    mean = jnp.mean(x, axis=-1, keepdims=True)
    centered = x - mean
    var = jnp.mean(centered * centered, axis=-1, keepdims=True)
    normed = centered * lax.rsqrt(var + LN_EPS)
    scaled = (normed * gamma_ref[...].reshape(1, 1, d)
              + beta_ref[...].reshape(1, 1, d))                    # beta before the (linear) mix

    # Conv1d(np, np, k=1, bias=False) for every batch in the block: batched (N,N)@(N,D) on MXU.
    w_b = jnp.broadcast_to(w_ref[...], (bt, n, n))
    tokens = jnp.einsum("bij,bjd->bid", w_b, scaled,
                        preferred_element_type=jnp.float32)        # (Bt, N, D)

    o_ref[...] = (x + tokens).astype(o_ref.dtype)                  # residual


def _pick_block_batch(B, N, D, itemsize, target_rows=1024, x_tile_budget=4 << 20):
    """Largest Bt dividing B with ~target_rows token rows and an x-tile within budget."""
    rows_cap = max(1, target_rows // max(N, 1))
    bytes_cap = max(1, x_tile_budget // max(N * D * itemsize, 1))
    bt = max(1, min(B, rows_cap, bytes_cap))
    while B % bt:
        bt -= 1
    return bt


def simple_reasoning(x, w, gamma, beta, *, block_batch=None):
    """SimpleReasoning forward. x: (B, N, D); w: (N, N) Conv1d(k=1) weight; gamma/beta: (D,)."""
    B, N, D = x.shape
    f32 = jnp.float32

    bt = block_batch if block_batch is not None else _pick_block_batch(
        B, N, D, jnp.dtype(x.dtype).itemsize)
    assert B % bt == 0, (B, bt)
    grid = (B // bt,)

    # One-time constant prep (would live as init-time parameters in a real model).
    w_f = w.astype(f32)                        # (N, N)
    gamma_row = gamma.astype(f32).reshape(1, D)
    beta_row = beta.astype(f32).reshape(1, D)

    return pl.pallas_call(
        _reason_kernel,
        out_shape=jax.ShapeDtypeStruct((B, N, D), x.dtype),
        grid_spec=pltpu.PrefetchScalarGridSpec(
            num_scalar_prefetch=0,
            grid=grid,
            in_specs=[
                pl.BlockSpec((N, N), lambda b: (0, 0)),         # W: same block every step
                pl.BlockSpec((1, D), lambda b: (0, 0)),         # gamma
                pl.BlockSpec((1, D), lambda b: (0, 0)),         # beta
                pl.BlockSpec((bt, N, D), lambda b: (b, 0, 0)),  # x batch block
            ],
            out_specs=pl.BlockSpec((bt, N, D), lambda b: (b, 0, 0)),
        ),
        input_output_aliases={3: 0},                 # residual written back over x's buffer
        compiler_params=pltpu.CompilerParams(
            dimension_semantics=("parallel",),       # shard batch blocks across TCs (v7x)
            vmem_limit_bytes=32 * 1024 * 1024,       # explicit headroom; blocks sized << this
        ),
    )(w_f, gamma_row, beta_row, x)


def reference(x, w, gamma, beta):
    x32 = x.astype(jnp.float32)
    mean = jnp.mean(x32, axis=-1, keepdims=True)
    var = jnp.mean((x32 - mean) ** 2, axis=-1, keepdims=True)
    normed = (x32 - mean) / jnp.sqrt(var + LN_EPS) * gamma + beta
    tokens = jnp.einsum("ij,bjd->bid", w.astype(jnp.float32), normed)
    return (x32 + tokens).astype(x.dtype)


if __name__ == "__main__":
    # SimpleReasoning(np=8 tokens, dim=32); batch = 2.
    B, N, D = 2, 8, 32
    key = jax.random.PRNGKey(0)
    kx, kw, kg, kb = jax.random.split(key, 4)

    x = jax.random.normal(kx, (B, N, D), dtype=jnp.float32)
    # Deterministic synthetic parameters (not a checkpoint).
    w = jax.random.normal(kw, (N, N), dtype=jnp.float32) * 0.1           # Conv1d(k=1) weight
    gamma = 1.0 + 0.1 * jax.random.normal(kg, (D,), dtype=jnp.float32)   # LayerNorm weight
    beta = 0.1 * jax.random.normal(kb, (D,), dtype=jnp.float32)          # LayerNorm bias

    ref = reference(x, w, gamma, beta)

    # Multi-step parallel grid (block_batch=1 -> grid=(2,)) exercises the batch tiling.
    out = jax.block_until_ready(simple_reasoning(x, w, gamma, beta, block_batch=1))
    assert out.shape == (B, N, D)
    err = jnp.max(jnp.abs(out - ref))
    assert jnp.allclose(out, ref, atol=1e-4, rtol=1e-4), f"max err {err}"

    # Auto-picked block (whole batch in one block at this toy size).
    out2 = jax.block_until_ready(simple_reasoning(x, w, gamma, beta))
    err2 = jnp.max(jnp.abs(out2 - ref))
    assert jnp.allclose(out2, ref, atol=1e-4, rtol=1e-4), f"max err {err2}"

    print("KERNEL_OK")
</pallas_src>

<mosaic_0001>
module attributes {stable_mosaic.version = 11 : i64} {
  func.func @_reason_kernel(%arg0: i32, %arg1: memref<8x8xf32, #tpu.memory_space<vmem>>, %arg2: memref<1x32xf32, #tpu.memory_space<vmem>>, %arg3: memref<1x32xf32, #tpu.memory_space<vmem>>, %arg4: memref<1x8x32xf32, #tpu.memory_space<vmem>>, %arg5: memref<1x8x32xf32, #tpu.memory_space<vmem>>) attributes {dimension_semantics = [#tpu.dimension_semantics<parallel>], iteration_bounds = array<i64: 2>, scalar_prefetch = 0 : i64, scratch_operands = 0 : i64, tpu.core_type = #tpu.core_type<tc>, window_params = [{pipeline_mode = #tpu.pipeline_mode<synchronous>, transform_indices = @transform_0, window_bounds = array<i64: 8, 8>}, {pipeline_mode = #tpu.pipeline_mode<synchronous>, transform_indices = @transform_1, window_bounds = array<i64: 1, 32>}, {pipeline_mode = #tpu.pipeline_mode<synchronous>, transform_indices = @transform_2, window_bounds = array<i64: 1, 32>}, {transform_indices = @transform_3, window_bounds = array<i64: 1, 8, 32>}, {transform_indices = @transform_4, window_bounds = array<i64: 1, 8, 32>}]} {
    %c0 = arith.constant 0 : index
    %c0_0 = arith.constant 0 : index
    %c0_1 = arith.constant 0 : index
    %0 = vector.load %arg4[%c0, %c0_0, %c0_1] : memref<1x8x32xf32, #tpu.memory_space<vmem>>, vector<1x8x32xf32>
    %cst = arith.constant dense<0.000000e+00> : vector<1x8xf32>
    %1 = vector.multi_reduction <add>, %0, %cst [2] : vector<1x8x32xf32> to vector<1x8xf32>
    %2 = vector.shape_cast %1 : vector<1x8xf32> to vector<1x8x1xf32>
    %cst_2 = arith.constant 3.200000e+01 : f32
    %3 = vector.broadcast %cst_2 : f32 to vector<1x8x1xf32>
    %4 = arith.divf %2, %3 : vector<1x8x1xf32>
    %5 = vector.broadcast %4 : vector<1x8x1xf32> to vector<1x8x32xf32>
    %6 = arith.subf %0, %5 : vector<1x8x32xf32>
    %7 = arith.mulf %6, %6 : vector<1x8x32xf32>
    %cst_3 = arith.constant dense<0.000000e+00> : vector<1x8xf32>
    %8 = vector.multi_reduction <add>, %7, %cst_3 [2] : vector<1x8x32xf32> to vector<1x8xf32>
    %9 = vector.shape_cast %8 : vector<1x8xf32> to vector<1x8x1xf32>
    %cst_4 = arith.constant 3.200000e+01 : f32
    %10 = vector.broadcast %cst_4 : f32 to vector<1x8x1xf32>
    %11 = arith.divf %9, %10 : vector<1x8x1xf32>
    %cst_5 = arith.constant 9.99999974E-6 : f32
    %12 = vector.broadcast %cst_5 : f32 to vector<1x8x1xf32>
    %13 = arith.addf %11, %12 : vector<1x8x1xf32>
    %14 = math.rsqrt %13 : vector<1x8x1xf32>
    %15 = vector.broadcast %14 : vector<1x8x1xf32> to vector<1x8x32xf32>
    %16 = arith.mulf %6, %15 : vector<1x8x32xf32>
    %c0_6 = arith.constant 0 : index
    %c0_7 = arith.constant 0 : index
    %17 = vector.load %arg2[%c0_6, %c0_7] : memref<1x32xf32, #tpu.memory_space<vmem>>, vector<1x32xf32>
    %18 = vector.shape_cast %17 : vector<1x32xf32> to vector<1x1x32xf32>
    %19 = vector.broadcast %18 : vector<1x1x32xf32> to vector<1x8x32xf32>
    %20 = arith.mulf %16, %19 : vector<1x8x32xf32>
    %c0_8 = arith.constant 0 : index
    %c0_9 = arith.constant 0 : index
    %21 = vector.load %arg3[%c0_8, %c0_9] : memref<1x32xf32, #tpu.memory_space<vmem>>, vector<1x32xf32>
    %22 = vector.shape_cast %21 : vector<1x32xf32> to vector<1x1x32xf32>
    %23 = vector.broadcast %22 : vector<1x1x32xf32> to vector<1x8x32xf32>
    %24 = arith.addf %20, %23 : vector<1x8x32xf32>
    %c0_10 = arith.constant 0 : index
    %c0_11 = arith.constant 0 : index
    %25 = vector.load %arg1[%c0_10, %c0_11] : memref<8x8xf32, #tpu.memory_space<vmem>>, vector<8x8xf32>
    %26 = vector.shape_cast %25 : vector<8x8xf32> to vector<1x8x8xf32>
    "tpu.trace_start"() <{level = 10 : i32, message = "bij,bjd->bid"}> : () -> ()
    %cst_12 = arith.constant dense<0.000000e+00> : vector<1x8x32xf32>
    %27 = tpu.matmul %26, %24, %cst_12 {dimension_numbers = #tpu.dot_dimension_numbers<[2], [1], [1], [2], [0, 0, 0, 1, 1, 2], [0], [0]>} : vector<1x8x8xf32>, vector<1x8x32xf32>, vector<1x8x32xf32> -> vector<1x8x32xf32>
    "tpu.trace_stop"() : () -> ()
    %28 = arith.addf %0, %27 : vector<1x8x32xf32>
    %c0_13 = arith.constant 0 : index
    %c0_14 = arith.constant 0 : index
    %c0_15 = arith.constant 0 : index
    %29 = vector.load %arg5[%c0_13, %c0_14, %c0_15] : memref<1x8x32xf32, #tpu.memory_space<vmem>>, vector<1x8x32xf32>
    tpu.vector_store %arg5[%c0_13, %c0_14, %c0_15], %28 {strides = array<i32>} : memref<1x8x32xf32, #tpu.memory_space<vmem>>, vector<1x8x32xf32>,
    return
  }
  func.func @transform_0(%arg0: i32) -> (i32, i32) {
    %c0_i32 = arith.constant 0 : i32
    %c0_i32_0 = arith.constant 0 : i32
    %c0_i32_1 = arith.constant 0 : i32
    return %c0_i32, %c0_i32_0 : i32, i32
  }
  func.func @transform_1(%arg0: i32) -> (i32, i32) {
    %c0_i32 = arith.constant 0 : i32
    %c0_i32_0 = arith.constant 0 : i32
    %c0_i32_1 = arith.constant 0 : i32
    return %c0_i32, %c0_i32_0 : i32, i32
  }
  func.func @transform_2(%arg0: i32) -> (i32, i32) {
    %c0_i32 = arith.constant 0 : i32
    %c0_i32_0 = arith.constant 0 : i32
    %c0_i32_1 = arith.constant 0 : i32
    return %c0_i32, %c0_i32_0 : i32, i32
  }
  func.func @transform_3(%arg0: i32) -> (i32, i32, i32) {
    %c0_i32 = arith.constant 0 : i32
    %c0_i32_0 = arith.constant 0 : i32
    %c0_i32_1 = arith.constant 0 : i32
    return %arg0, %c0_i32, %c0_i32_0 : i32, i32, i32
  }
  func.func @transform_4(%arg0: i32) -> (i32, i32, i32) {
    %c0_i32 = arith.constant 0 : i32
    %c0_i32_0 = arith.constant 0 : i32
    %c0_i32_1 = arith.constant 0 : i32
    return %arg0, %c0_i32, %c0_i32_0 : i32, i32, i32
  }
}

</mosaic_0001>

<llo_original>
// kernel: tpu_custom_call.1
$region0: #{tpu_custom_call.1}
  #allocation0 [shape = 'u32[]', space=smem, size = 0x4, offset = 0x4, fixed_abs, tag = 'smem constant byte address 0x4 - core index']
  #allocation1 [shape = 'u32[72,128]{1,0:T(1,128)}', space=vmem, size = 0x9000, scoped, tag = 'internal scratch']
  %s0 = inlined_call_operand.vmem [shape: f32[8,8], index: 0, kind: input, shape index: {}]
  %s1 = inlined_call_operand.vmem [shape: f32[1,32], index: 1, kind: input, shape index: {}]
  %s2 = inlined_call_operand.vmem [shape: f32[1,32], index: 2, kind: input, shape index: {}]
  %s3 = inlined_call_operand.hbm [shape: f32[2,8,32], index: 3, kind: input, shape index: {}, may-alias: {3,4}]
  %s4 = inlined_call_operand.hbm [shape: f32[2,8,32], index: 4, kind: output, shape index: {}, may-alias: {3,4}]
  %s5 = sld [smem:[#allocation0]]
  $region53: #{tpu_custom_call.1} parent=0
    _
  %s7 = ssub.s32 1, %s5
  %s8 = scalar_select 0, %s7, %s5
  $region1: #{tpu_custom_call.1} parent=0
    #allocation2 [shape = 'u8[8192]{0}', space=vmem, size = 0x2000, scoped, tag = 'input window, operand 3']
    #allocation3 [shape = 's32[2]{0}', space=sflag, size = 0x8, scoped, tag = 'scoped memory for tpu_custom_call.1']
    #allocation4 [shape = 's32[2]{0}', space=sflag, size = 0x8, scoped, tag = 'scoped memory for tpu_custom_call.1']
    #allocation5 [shape = 'u8[8192]{0}', space=vmem, size = 0x2000, scoped, tag = 'output window, operand 0']
    %9 = vsyncpa [#allocation3], 0
    %s10 = scalar_lea.sflag [#allocation3], 1
    %11 = vsyncpa %s10, 0
    %12 = vsyncpa [#allocation4], 0
    %s13 = scalar_lea.sflag [#allocation4], 1
    %14 = vsyncpa %s13, 0
    loop: start=0, step=1, limit=4
    $region2: #{tpu_custom_call.1} parent=1 // loop_pre_header
      _
    $region3: #{tpu_custom_call.1} parent=1 // loop_header
      %s16 = sphi 0, %s20
      %p17 = scmp.ge.s32.totalorder %s16, 4
      %s24 = sphi 0, %s24
      %s26 = sphi 0, %s24
      %s27 = sphi 0, %s26
      %s41 = sphi 0, %s27
      %s45 = sphi 0, %s45
      %s47 = sphi 0, %s45
      %s48 = sphi 0, %s47
      %s62 = sphi 0, %s48
      %s66 = sphi 0, %s66
      %s68 = sphi 0, %s66
      %s69 = sphi 0, %s68
      %s83 = sphi 0, %s69
      %s89 = sphi 0, %s91
      %s92 = sphi 0, %s89
      %s93 = sphi 0, %s92
      %s109 = sphi 0, %s93
      %s115 = sphi 0, %s117
      %s118 = sphi 0, %s115
      %s119 = sphi 0, %s118
      %s135 = sphi 0, %s119
    $region4: #{tpu_custom_call.1} parent=1 // loop_header_branch
      %19 = sbr.rel (%p17) target = $region8
    $region5: #{tpu_custom_call.1} parent=1 // loop_body
      %s21 = ssub.s32 %s16, 1
      %s22 = ssub.s32 %s16, 2
      %s23 = sadd.s32 %s16, 1
      %s25 = sadd.s32 %s24, 1
      %p28 = scmp.eq.s32.totalorder %s16, 1
      %p29 = scmp.ne.s32.totalorder %s24, %s26
      %p30 = scmp.eq.s32.totalorder %s16, 0
      %p31 = por %p29, %p30
      %p32 = scmp.ne.s32.totalorder %s24, %s26
      %p33 = scmp.eq.s32.totalorder %s21, 1
      %p34 = por %p32, %p33
      %p35 = scmp.ne.s32.totalorder %s26, %s27
      %p36 = scmp.eq.s32.totalorder %s21, 0
      %p37 = por %p35, %p36
      %p38 = scmp.ne.s32.totalorder %s26, %s27
      %p39 = scmp.eq.s32.totalorder %s22, 1
      %p40 = por %p38, %p39
      %p42 = scmp.ne.s32.totalorder %s27, %s41
      %p43 = scmp.eq.s32.totalorder %s22, 0
      %p44 = por %p42, %p43
      %s46 = sadd.s32 %s45, 1
      %p49 = scmp.eq.s32.totalorder %s16, 1
      %p50 = scmp.ne.s32.totalorder %s45, %s47
      %p51 = scmp.eq.s32.totalorder %s16, 0
      %p52 = por %p50, %p51
      %p53 = scmp.ne.s32.totalorder %s45, %s47
      %p54 = scmp.eq.s32.totalorder %s21, 1
      %p55 = por %p53, %p54
      %p56 = scmp.ne.s32.totalorder %s47, %s48
      %p57 = scmp.eq.s32.totalorder %s21, 0
      %p58 = por %p56, %p57
      %p59 = scmp.ne.s32.totalorder %s47, %s48
      %p60 = scmp.eq.s32.totalorder %s22, 1
      %p61 = por %p59, %p60
      %p63 = scmp.ne.s32.totalorder %s48, %s62
      %p64 = scmp.eq.s32.totalorder %s22, 0
      %p65 = por %p63, %p64
      %s67 = sadd.s32 %s66, 1
      %p70 = scmp.eq.s32.totalorder %s16, 1
      %p71 = scmp.ne.s32.totalorder %s66, %s68
      %p72 = scmp.eq.s32.totalorder %s16, 0
      %p73 = por %p71, %p72
      %p74 = scmp.ne.s32.totalorder %s66, %s68
      %p75 = scmp.eq.s32.totalorder %s21, 1
      %p76 = por %p74, %p75
      %p77 = scmp.ne.s32.totalorder %s68, %s69
      %p78 = scmp.eq.s32.totalorder %s21, 0
      %p79 = por %p77, %p78
      %p80 = scmp.ne.s32.totalorder %s68, %s69
      %p81 = scmp.eq.s32.totalorder %s22, 1
      %p82 = por %p80, %p81
      %p84 = scmp.ne.s32.totalorder %s69, %s83
      %p85 = scmp.eq.s32.totalorder %s22, 0
      %p86 = por %p84, %p85
      %s87 = ssub.s32 %s16, %s23
      %p88 = scmp.eq.s32.totalorder %s87, 0
      %s90 = sadd.s32 %s89, 1
      %s91 = scalar_select %p88, %s89, %s90
      %p94 = pneg %p88
      %p95 = scmp.eq.s32.totalorder %s16, 1
      %p96 = por %p94, %p95
      %p97 = scmp.ne.s32.totalorder %s89, %s92
      %p98 = scmp.eq.s32.totalorder %s16, 0
      %p99 = por %p97, %p98
      %p100 = scmp.ne.s32.totalorder %s89, %s92
      %p101 = scmp.eq.s32.totalorder %s21, 1
      %p102 = por %p100, %p101
      %p103 = scmp.ne.s32.totalorder %s92, %s93
      %p104 = scmp.eq.s32.totalorder %s21, 0
      %p105 = por %p103, %p104
      %p106 = scmp.ne.s32.totalorder %s92, %s93
      %p107 = scmp.eq.s32.totalorder %s22, 1
      %p108 = por %p106, %p107
      %p110 = scmp.ne.s32.totalorder %s93, %s109
      %p111 = scmp.eq.s32.totalorder %s22, 0
      %p112 = por %p110, %p111
      %s113 = ssub.s32 %s16, %s23
      %p114 = scmp.eq.s32.totalorder %s113, 0
      %s116 = sadd.s32 %s115, 1
      %s117 = scalar_select %p114, %s115, %s116
      %p120 = pneg %p114
      %p121 = scmp.eq.s32.totalorder %s16, 1
      %p122 = por %p120, %p121
      %p123 = scmp.ne.s32.totalorder %s115, %s118
      %p124 = scmp.eq.s32.totalorder %s16, 0
      %p125 = por %p123, %p124
      %p126 = scmp.ne.s32.totalorder %s115, %s118
      %p127 = scmp.eq.s32.totalorder %s21, 1
      %p128 = por %p126, %p127
      %p129 = scmp.ne.s32.totalorder %s118, %s119
      %p130 = scmp.eq.s32.totalorder %s21, 0
      %p131 = por %p129, %p130
      %p132 = scmp.ne.s32.totalorder %s118, %s119
      %p133 = scmp.eq.s32.totalorder %s22, 1
      %p134 = por %p132, %p133
      %p136 = scmp.ne.s32.totalorder %s119, %s135
      %p137 = scmp.eq.s32.totalorder %s22, 0
      %p138 = por %p136, %p137
      %p139 = scmp.le.s32.totalorder 1, %s16
      %p140 = scmp.lt.s32.totalorder %s16, 3
      %p141 = pnand %p139, %p140
      %p142 = pneg %p141
      // Predicated region
      $region9: #{tpu_custom_call.1} parent=5 // pred_check
        _
      $region10: #{tpu_custom_call.1} parent=5 // pred_check_branch
        %144 = sbr.rel (%p141) target = $region12
      $region11: #{tpu_custom_call.1} parent=5 // pred_region
        %s145 = ssub.s32 %s16, 1
        // Predicated region
        $region13: #{tpu_custom_call.1} parent=11 // pred_check
          %p146 = pneg %p37
        $region14: #{tpu_custom_call.1} parent=11 // pred_check_branch
          %148 = sbr.rel (%p146) target = $region16
        $region15: #{tpu_custom_call.1} parent=11 // pred_region
          _
        $region16: #{tpu_custom_call.1} parent=11 // pred_fallthru
          _
        // Predicated region
        $region17: #{tpu_custom_call.1} parent=11 // pred_check
          %p149 = pneg %p58
        $region18: #{tpu_custom_call.1} parent=11 // pred_check_branch
          %151 = sbr.rel (%p149) target = $region20
        $region19: #{tpu_custom_call.1} parent=11 // pred_region
          _
        $region20: #{tpu_custom_call.1} parent=11 // pred_fallthru
          _
        // Predicated region
        $region21: #{tpu_custom_call.1} parent=11 // pred_check
          %p152 = pneg %p79
        $region22: #{tpu_custom_call.1} parent=11 // pred_check_branch
          %154 = sbr.rel (%p152) target = $region24
        $region23: #{tpu_custom_call.1} parent=11 // pred_region
          _
        $region24: #{tpu_custom_call.1} parent=11 // pred_fallthru
          _
      $region12: #{tpu_custom_call.1} parent=5 // pred_fallthru
        _
      %p155 = scmp.lt.s32.totalorder %s16, 2
      // Predicated region
      $region25: #{tpu_custom_call.1} parent=5 // pred_check
        %p156 = pneg %p155
      $region26: #{tpu_custom_call.1} parent=5 // pred_check_branch
        %158 = sbr.rel (%p156) target = $region28
      $region27: #{tpu_custom_call.1} parent=5 // pred_region
        // Predicated region
        $region29: #{tpu_custom_call.1} parent=27 // pred_check
          %p159 = pneg %p99
        $region30: #{tpu_custom_call.1} parent=27 // pred_check_branch
          %161 = sbr.rel (%p159) target = $region32
        $region31: #{tpu_custom_call.1} parent=27 // pred_region
          %s162 = sand.u32 %s89, 1
          %s163 = scalar_lea.sflag [#allocation3], %s162
          %s164 = sand.u32 %s89, 1
          %s165 = smul.addr %s164, 8
          %s166 = scalar_lea.vmem [#allocation2], %s165
          %168 = vsyncadd %s163, 0
          %s169 = smul.addr %s16, 8
          %s170 = scalar_lea.hbm %s3, %s169
          %s172 = sshll.u32 %s170, 4
          %s173 = int_to_ptr.hbm [resolvable:$true] %s172
          %s174 = sshll.u32 %s166, 4
          %s175 = int_to_ptr.vmem [resolvable:$true] %s174
          %177 = dma.hbm_to_vmem [thread:$0]  %s173, 128, %s175, %s163
        $region32: #{tpu_custom_call.1} parent=27 // pred_fallthru
          _
      $region28: #{tpu_custom_call.1} parent=5 // pred_fallthru
        _
      %p178 = scmp.le.s32.totalorder 1, %s16
      %p179 = scmp.lt.s32.totalorder %s16, 3
      %p180 = pnand %p178, %p179
      %p181 = pneg %p180
      // Predicated region
      $region33: #{tpu_custom_call.1} parent=5 // pred_check
        _
      $region34: #{tpu_custom_call.1} parent=5 // pred_check_branch
        %183 = sbr.rel (%p180) target = $region36
      $region35: #{tpu_custom_call.1} parent=5 // pred_region
        %s184 = ssub.s32 %s16, 1
        %s185 = sand.u32 %s92, 1
        %s186 = scalar_lea.sflag [#allocation3], %s185
        %s187 = sand.u32 %s92, 1
        %s188 = smul.addr %s187, 8
        %s189 = scalar_lea.vmem [#allocation2], %s188
        // Predicated region
        $region37: #{tpu_custom_call.1} parent=35 // pred_check
          %p190 = pneg %p105
        $region38: #{tpu_custom_call.1} parent=35 // pred_check_branch
          %192 = sbr.rel (%p190) target = $region40
        $region39: #{tpu_custom_call.1} parent=35 // pred_region
          %194 = dma.done %s186, 128
        $region40: #{tpu_custom_call.1} parent=35 // pred_fallthru
          _
        %p195 = pneg %p37
        %p196 = pneg %p34
        %p197 = pneg %p58
        %p198 = pneg %p55
        %p199 = pneg %p79
        %p200 = pneg %p76
        %s201 = sand.u32 %s92, 1
        %s202 = scalar_lea.sflag [#allocation3], %s201
        %s203 = sand.u32 %s92, 1
        %s204 = smul.addr %s203, 8
        %s205 = scalar_lea.vmem [#allocation2], %s204
        %p206 = pneg %p105
        %p207 = pneg %p102
        %p208 = pneg %p131
        %p209 = pneg %p128
        %s210 = sand.u32 %s118, 1
        %s211 = scalar_lea.sflag [#allocation4], %s210
        %s212 = sand.u32 %s118, 1
        %s213 = smul.addr %s212, 8
        %s214 = scalar_lea.vmem [#allocation5], %s213
        %v215 = vld [vmem:[%s189] sm:$0xff]
        %vm216 = vcmask 261120
        %v217 = vsel %vm216, %v215, 0.0
        %218 = vadd.xlane.f32.xlu0 %v217
        %v219 = vpop.xlane.xlu0 %218
        %v220 = vrcp.pop 32.0
        %v221 = vmul.f32 32.0, %v220
        %v222 = vsub.f32 1.0, %v221
        %v223 = vmul.f32 %v220, %v222
        %v224 = vadd.f32 %v220, %v223
        %vm225 = vweird.f32 %v220
        %v226 = vsel %vm225, %v220, %v224
        %v227 = vmul.f32 %v219, %v226
        %v228 = vsub.f32 %v215, %v227
        %v229 = vmul.f32 %v228, %v228
        %v230 = vsel %vm216, %v229, 0.0
        %231 = vadd.xlane.f32.xlu0 %v230
        %v232 = vpop.xlane.xlu0 %231
        %v233 = vmul.f32 %v232, %v226
        %v234 = vadd.f32 %v233, 1e-05
        %v235 = vrsqrt.pop %v234
        %v236 = vmul.f32 %v235, %v234
        %v237 = vmul.f32 %v236, %v235
        %v238 = vmul.f32 0.5, %v237
        %v239 = vsub.f32 1.5, %v238
        %v240 = vmul.f32 %v235, %v239
        %vm241 = vweird.f32 %v234
        %vm242 = vweird.f32 %v235
        %vm243 = vmor %vm241, %vm242
        %v244 = vsel %vm243, %v235, %v240
        %v245 = vmul.f32 %v228, %v244
        %v246 = vld [vmem:[%s1] sm:$0x1]
        %v248 = vperm.slane %v246, 0
        %v250 = vmul.f32 %v245, %v248
        %v251 = vld [vmem:[%s2] sm:$0x1]
        %v253 = vperm.slane %v251, 0
        %v255 = vadd.f32 %v250, %v253
        %v256 = vld [vmem:[%s0] sm:$0xff]
        %vm257 = vcmask 64512
        %v259 = vsel %vm257, %v256, 0
        %261 = vmatpush.msra.mxu0 0.0
        %262 = vmatpush.msra.mxu0 0.0
        %263 = vmatpush.msra.mxu0 0.0
        %264 = vmatpush.msra.mxu0 0.0
        %265 = vmatpush.msra.mxu0 0.0
        %266 = vmatpush.msra.mxu0 0.0
        %267 = vmatpush.msra.mxu0 0.0
        %268 = vmatpush.msra.mxu0 0.0
        %269 = vmatpush.msra.mxu0 0.0
        %270 = vmatpush.msra.mxu0 0.0
        %271 = vmatpush.msra.mxu0 0.0
        %272 = vmatpush.msra.mxu0 0.0
        %273 = vmatpush.msra.mxu0 0.0
        %274 = vmatpush.msra.mxu0 0.0
        %275 = vmatpush.msra.mxu0 0.0
        %276 = vmatpush.msra.mxu0 %v255
        %277 = vmatmul.f32.gmra.mxu0 %v259
        %v278 = vpop.f32.mrf.mxu0
        %v279 = vadd.f32 0.0, %v278
        %280 = vdwg.mxu0
        %v281 = vadd.f32 %v215, %v279
        %282 = vst.msk [vmem:[%s214] sm:$0xff] %vm216, %v281
        %s283 = sand.u32 %s118, 1
        %s284 = scalar_lea.sflag [#allocation4], %s283
        %s285 = sand.u32 %s118, 1
        %s286 = smul.addr %s285, 8
        %s287 = scalar_lea.vmem [#allocation5], %s286
        // Predicated region
        $region41: #{tpu_custom_call.1} parent=35 // pred_check
          %p288 = pneg %p128
        $region42: #{tpu_custom_call.1} parent=35 // pred_check_branch
          %290 = sbr.rel (%p288) target = $region44
        $region43: #{tpu_custom_call.1} parent=35 // pred_region
          %292 = vsyncadd %s284, 0
          %s293 = smul.addr %s21, 8
          %s294 = scalar_lea.hbm %s4, %s293
          %s296 = sshll.u32 %s287, 4
          %s297 = int_to_ptr.vmem [resolvable:$true] %s296
          %s298 = sshll.u32 %s294, 4
          %s299 = int_to_ptr.hbm [resolvable:$true] %s298
          %301 = dma.vmem_to_hbm [thread:$0]  %s297, 128, %s299, %s284
        $region44: #{tpu_custom_call.1} parent=35 // pred_fallthru
          _
      $region36: #{tpu_custom_call.1} parent=5 // pred_fallthru
        _
      %p302 = scmp.le.s32.totalorder 2, %s16
      // Predicated region
      $region45: #{tpu_custom_call.1} parent=5 // pred_check
        %p303 = pneg %p302
      $region46: #{tpu_custom_call.1} parent=5 // pred_check_branch
        %305 = sbr.rel (%p303) target = $region48
      $region47: #{tpu_custom_call.1} parent=5 // pred_region
        %s306 = ssub.s32 %s16, 2
        // Predicated region
        $region49: #{tpu_custom_call.1} parent=47 // pred_check
          %p307 = pneg %p134
        $region50: #{tpu_custom_call.1} parent=47 // pred_check_branch
          %309 = sbr.rel (%p307) target = $region52
        $region51: #{tpu_custom_call.1} parent=47 // pred_region
          %s310 = sand.u32 %s119, 1
          %s311 = scalar_lea.sflag [#allocation4], %s310
          %s312 = sand.u32 %s119, 1
          %s313 = smul.addr %s312, 8
          %s314 = scalar_lea.vmem [#allocation5], %s313
          %316 = dma.done %s311, 128
        $region52: #{tpu_custom_call.1} parent=47 // pred_fallthru
          _
      $region48: #{tpu_custom_call.1} parent=5 // pred_fallthru
        _
    $region6: #{tpu_custom_call.1} parent=1 // loop_footer
      %s20 = sadd.s32 1, %s16
    $region7: #{tpu_custom_call.1} parent=1 // loop_footer_branch
      %15 = sbr.rel target = $region3
    $region8: #{tpu_custom_call.1} parent=1 // loop_exit
      _
    %317 = vsyncpa [#allocation3], 1
    %s318 = scalar_lea.sflag [#allocation3], 1
    %319 = vsyncpa %s318, 1
    %320 = vsyncpa [#allocation4], 1
    %s321 = scalar_lea.sflag [#allocation4], 1
    %322 = vsyncpa %s321, 1

</llo_original>
